<compile_context>
chip_gen: v5e
topology: v5e:2x2
jax: 0.10.0
libtpu: 0.0.40
codegen_flags: <defaults>
</compile_context>

<pallas_src>
import functools

import jax
import jax.numpy as jnp
from jax.experimental import pallas as pl
from jax.experimental.pallas import tpu as pltpu

_LANE = 128
_SUBLANE = 8
_VMEM_LIMIT_BYTES = 32 * 1024 * 1024


def _round_up(v, m):
    return ((v + m - 1) // m) * m


def _default_tile_bytes():
    """Per-tile byte budget, scaled with the chip's HBM bandwidth."""
    try:
        kind = jax.devices()[0].device_kind.lower()
    except Exception:
        kind = ""
    if "v7" in kind or "tpu7" in kind:
        # v7x: ~2.3x HBM BW per TensorCore -> a 1 MiB tile only covers ~0.5us
        # of DMA and the fixed ~0.35us step overhead starts to show.
        return 2 * 1024 * 1024
    # v5e / v6e: ~1 MiB f32 tiles already sit at ~86% of the HBM roofline.
    return 1 * 1024 * 1024


def _choose_view_cols(shape, n, itemsize, tile_bytes):
    """Column count of a zero-copy 2-D view of the flattened tensor.

    Returns None when no reasonable zero-copy view exists (rare); the caller
    then falls back to padding (one extra copy per input).
    """
    if n % _LANE == 0:
        return _LANE  # fully lane-dense slab, ideal layout, no copies
    # Ragged element count: merge trailing dims (always an exact, metadata-
    # only reshape) and take the widest column count whose minimum (8-row)
    # block still fits the tile budget, preferring views that keep >= 8 rows
    # (sublane-dense) so the grid can still be split across cores.
    candidates = []
    c = 1
    for d in reversed(shape):
        c *= int(d)
        if c * _SUBLANE * itemsize > tile_bytes:
            break
        candidates.append(c)
    if not candidates:
        return None
    wide = [c for c in candidates if n // c >= _SUBLANE]
    best = max(wide) if wide else max(candidates)
    return best if best >= _SUBLANE else None


def _residual_kernel(gamma_ref, shortcut_ref, resid_ref, out_ref):
    # gamma_ref: (1,) f32 scalar in SMEM; tensors: (block_rows, cols) VMEM tiles.
    g = gamma_ref[0]
    sc = shortcut_ref[...].astype(jnp.float32)
    rs = resid_ref[...].astype(jnp.float32)
    out_ref[...] = (sc + g * rs).astype(out_ref.dtype)


def residual_forward(x, gamma, residual_fn=None, shortcut_fn=None,
                     *, tile_bytes=None):
    """Pallas implementation of Residual.forward.

    x           : jnp array, any shape (NCHW in the tests below).
    gamma       : scalar parameter (shape (1,) or ()).
    residual_fn : JAX fn for the nn.Sequential branch (default Identity).
    shortcut_fn : JAX fn for the shortcut branch   (default Identity).
    """
    if residual_fn is None:
        residual_fn = lambda t: t   # nn.Sequential() with no layers == Identity
    if shortcut_fn is None:
        shortcut_fn = lambda t: t   # nn.Identity()

    sc = shortcut_fn(x)
    rs = residual_fn(x)
    assert sc.shape == rs.shape, "shortcut/residual branches must match"
    out_dtype = jnp.promote_types(sc.dtype, rs.dtype)

    orig_shape = sc.shape
    n = sc.size
    itemsize = jnp.dtype(out_dtype).itemsize
    if tile_bytes is None:
        tile_bytes = _default_tile_bytes()

    cols = _choose_view_cols(orig_shape, n, itemsize, tile_bytes)
    if cols is None:
        # Rare fallback (e.g. trailing dims too small/too large to form a
        # usable view): pad the flat view to a multiple of 128.
        pad = (-n) % _LANE
        sc2d = jnp.pad(sc.reshape(-1), (0, pad)).reshape(-1, _LANE)
        rs2d = jnp.pad(rs.reshape(-1), (0, pad)).reshape(-1, _LANE)
        cols, padded = _LANE, True
    else:
        sc2d = sc.reshape(-1, cols)   # exact reshape: metadata only, no copy
        rs2d = rs.reshape(-1, cols)
        padded = False
    rows = sc2d.shape[0]

    # Tile rows: as large as the byte budget allows (multiple of 8), but when
    # the whole array would fit in <= 2 tiles, split it into (at least) two
    # near-equal blocks so the "parallel" grid axis can be sharded across
    # v7x's two TensorCores (no-op on single-core v5e/v6e).
    max_block_rows = max(
        _SUBLANE, (tile_bytes // (cols * itemsize)) // _SUBLANE * _SUBLANE)
    if rows <= _SUBLANE:
        block_rows = rows                       # one tiny block, full extent
    elif rows <= 2 * max_block_rows:
        block_rows = min(max_block_rows,
                         _round_up(pl.cdiv(rows, 2), _SUBLANE))
    else:
        block_rows = max_block_rows
    grid = (pl.cdiv(rows, block_rows),)

    gamma_arr = jnp.asarray(gamma, dtype=jnp.float32).reshape(1)
    tensor_spec = pl.BlockSpec((block_rows, cols), lambda i: (i, 0))

    # Alias the shortcut input buffer to the output (one fewer full-size HBM
    # allocation) only when the two branch outputs are distinct arrays with a
    # matching dtype; otherwise the alias would just make XLA insert a copy.
    io_aliases = {} if (sc is rs or sc.dtype != out_dtype) else {1: 0}

    out2d = pl.pallas_call(
        _residual_kernel,
        out_shape=jax.ShapeDtypeStruct((rows, cols), out_dtype),
        grid_spec=pltpu.PrefetchScalarGridSpec(
            num_scalar_prefetch=0,
            grid=grid,
            in_specs=[
                pl.BlockSpec(memory_space=pltpu.SMEM),  # gamma scalar
                tensor_spec,                            # shortcut tile
                tensor_spec,                            # residual tile
            ],
            out_specs=tensor_spec,
        ),
        input_output_aliases=io_aliases,
        cost_estimate=pl.CostEstimate(
            flops=2 * n, transcendentals=0, bytes_accessed=3 * n * itemsize),
        compiler_params=pltpu.CompilerParams(
            dimension_semantics=("parallel",),
            vmem_limit_bytes=_VMEM_LIMIT_BYTES),
    )(gamma_arr, sc2d, rs2d)

    out_flat = out2d.reshape(-1)
    if padded:
        out_flat = out_flat[:n]
    return out_flat.reshape(orig_shape)


if __name__ == "__main__":
    key = jax.random.PRNGKey(0)
    # NCHW input at the module's natural small scale; default-constructed
    # Residual: both branches are Identity, gamma initialised to zeros(1).
    x = jax.random.normal(key, (2, 4, 16, 16), dtype=jnp.float32)
    gamma0 = jnp.zeros((1,), dtype=jnp.float32)

    fwd = jax.jit(residual_forward)

    out = jax.block_until_ready(fwd(x, gamma0))
    ref = x + gamma0[0] * x
    assert out.shape == x.shape and out.dtype == x.dtype
    assert jnp.allclose(out, ref, atol=1e-6), "mismatch (gamma=0)"

    # Non-zero gamma exercises the scale-add path.
    gamma1 = jnp.array([0.37], dtype=jnp.float32)
    out1 = jax.block_until_ready(fwd(x, gamma1))
    assert jnp.allclose(out1, x + gamma1[0] * x, atol=1e-6), "mismatch (gamma=0.37)"

    # Multi-block, 128-aligned path: 3*16*56*56 = 150528 elems -> 1176 rows,
    # split into a balanced 2-step grid.
    xl = jax.random.normal(jax.random.PRNGKey(1), (3, 16, 56, 56), jnp.float32)
    outl = jax.block_until_ready(fwd(xl, gamma1))
    assert jnp.allclose(outl, xl + gamma1[0] * xl, atol=1e-6), "mismatch (multi-block)"

    # Ragged element count (15000 % 128 != 0): handled with a zero-copy
    # (300, 50) trailing-dims view -- no jnp.pad / output slice round trip.
    xo = jax.random.normal(jax.random.PRNGKey(2), (2, 3, 50, 50), jnp.float32)
    outo = jax.block_until_ready(fwd(xo, gamma1))
    assert jnp.allclose(outo, xo + gamma1[0] * xo, atol=1e-6), "mismatch (ragged)"

    # Non-identity residual branch: distinct shortcut/residual buffers, so the
    # input_output_aliases={1: 0} path is exercised.
    fwd_tanh = jax.jit(functools.partial(residual_forward, residual_fn=jnp.tanh))
    outt = jax.block_until_ready(fwd_tanh(x, gamma1))
    reft = x + gamma1[0] * jnp.tanh(x)
    assert jnp.allclose(outt, reft, atol=1e-5), "mismatch (non-identity residual)"

    print("KERNEL_OK")
</pallas_src>

<mosaic_0001>
module attributes {stable_mosaic.version = 11 : i64} {
  func.func @_residual_kernel(%arg0: i32, %arg1: memref<1xf32, #tpu.memory_space<smem>>, %arg2: memref<8x128xf32, #tpu.memory_space<vmem>>, %arg3: memref<8x128xf32, #tpu.memory_space<vmem>>, %arg4: memref<8x128xf32, #tpu.memory_space<vmem>>) attributes {dimension_semantics = [#tpu.dimension_semantics<parallel>], iteration_bounds = array<i64: 2>, scalar_prefetch = 0 : i64, scratch_operands = 0 : i64, tpu.core_type = #tpu.core_type<tc>, window_params = [{transform_indices = @transform_0, window_bounds = array<i64: 1>}, {transform_indices = @transform_1, window_bounds = array<i64: 8, 128>}, {transform_indices = @transform_2, window_bounds = array<i64: 8, 128>}, {transform_indices = @transform_3, window_bounds = array<i64: 8, 128>}]} {
    %c0 = arith.constant 0 : index
    %0 = memref.load %arg1[%c0] : memref<1xf32, #tpu.memory_space<smem>>
    %c0_0 = arith.constant 0 : index
    %c0_1 = arith.constant 0 : index
    %1 = vector.load %arg2[%c0_0, %c0_1] : memref<8x128xf32, #tpu.memory_space<vmem>>, vector<8x128xf32>
    %c0_2 = arith.constant 0 : index
    %c0_3 = arith.constant 0 : index
    %2 = vector.load %arg3[%c0_2, %c0_3] : memref<8x128xf32, #tpu.memory_space<vmem>>, vector<8x128xf32>
    %3 = vector.broadcast %0 : f32 to vector<8x128xf32>
    %4 = arith.mulf %3, %2 : vector<8x128xf32>
    %5 = arith.addf %1, %4 : vector<8x128xf32>
    %c0_4 = arith.constant 0 : index
    %c0_5 = arith.constant 0 : index
    %6 = vector.load %arg4[%c0_4, %c0_5] : memref<8x128xf32, #tpu.memory_space<vmem>>, vector<8x128xf32>
    tpu.vector_store %arg4[%c0_4, %c0_5], %5 {strides = array<i32>} : memref<8x128xf32, #tpu.memory_space<vmem>>, vector<8x128xf32>,
    return
  }
  func.func @transform_0(%arg0: i32) -> i32 {
    %c0_i32 = arith.constant 0 : i32
    %c0_i32_0 = arith.constant 0 : i32
    return %c0_i32 : i32
  }
  func.func @transform_1(%arg0: i32) -> (i32, i32) {
    %c0_i32 = arith.constant 0 : i32
    %c0_i32_0 = arith.constant 0 : i32
    return %arg0, %c0_i32 : i32, i32
  }
  func.func @transform_2(%arg0: i32) -> (i32, i32) {
    %c0_i32 = arith.constant 0 : i32
    %c0_i32_0 = arith.constant 0 : i32
    return %arg0, %c0_i32 : i32, i32
  }
  func.func @transform_3(%arg0: i32) -> (i32, i32) {
    %c0_i32 = arith.constant 0 : i32
    %c0_i32_0 = arith.constant 0 : i32
    return %arg0, %c0_i32 : i32, i32
  }
}

</mosaic_0001>

<llo_original>
// kernel: residual_forward.1
$region0: #{residual_forward.1}
  #allocation0 [shape = 'u32[]', space=smem, size = 0x4, offset = 0x4, fixed_abs, tag = 'smem constant byte address 0x4 - core index']
  #allocation1 [shape = 'u32[72,128]{1,0:T(1,128)}', space=vmem, size = 0x9000, scoped, tag = 'internal scratch']
  #allocation2 [shape = 'f32[1]{0:T(128)S(6)}', space=smem, size = 0x200, scoped, tag = 'scoped memory for residual_forward.1']
  %s0 = inlined_call_operand.<no memory space> [shape: f32[1], index: 0, kind: input, shape index: {}]
  %s1 = inlined_call_operand.vmem [shape: f32[16,128], index: 1, kind: input, shape index: {}, may-alias: {1,2}]
  %s2 = inlined_call_operand.vmem [shape: f32[16,128], index: 2, kind: input, shape index: {}, may-alias: {1,2}]
  %s3 = inlined_call_operand.vmem [shape: f32[16,128], index: 3, kind: output, shape index: {}]
  %s4 = sld [smem:[#allocation0]]
  $region45: #{residual_forward.1} parent=0
    _
  %s6 = ssub.s32 1, %s4
  %s7 = scalar_select 0, %s6, %s4
  %8 = sst [smem:[#allocation2]] %s0
  loop: start=0, step=1, limit=4
  $region2: #{residual_forward.1} parent=0 // loop_pre_header
    _
  $region3: #{residual_forward.1} parent=0 // loop_header
    %s10 = sphi 0, %s14
    %p11 = scmp.ge.s32.totalorder %s10, 4
    %s18 = sphi 0, %s18
    %s20 = sphi 0, %s18
    %s21 = sphi 0, %s20
    %s35 = sphi 0, %s21
    %s41 = sphi 0, %s43
    %s44 = sphi 0, %s41
    %s45 = sphi 0, %s44
    %s61 = sphi 0, %s45
    %s67 = sphi 0, %s69
    %s70 = sphi 0, %s67
    %s71 = sphi 0, %s70
    %s87 = sphi 0, %s71
    %s93 = sphi 0, %s95
    %s96 = sphi 0, %s93
    %s97 = sphi 0, %s96
    %s113 = sphi 0, %s97
  $region4: #{residual_forward.1} parent=0 // loop_header_branch
    %13 = sbr.rel (%p11) target = $region8
  $region5: #{residual_forward.1} parent=0 // loop_body
    %s15 = ssub.s32 %s10, 1
    %s16 = ssub.s32 %s10, 2
    %s17 = sadd.s32 %s10, 1
    %s19 = sadd.s32 %s18, 1
    %p22 = scmp.eq.s32.totalorder %s10, 1
    %p23 = scmp.ne.s32.totalorder %s18, %s20
    %p24 = scmp.eq.s32.totalorder %s10, 0
    %p25 = por %p23, %p24
    %p26 = scmp.ne.s32.totalorder %s18, %s20
    %p27 = scmp.eq.s32.totalorder %s15, 1
    %p28 = por %p26, %p27
    %p29 = scmp.ne.s32.totalorder %s20, %s21
    %p30 = scmp.eq.s32.totalorder %s15, 0
    %p31 = por %p29, %p30
    %p32 = scmp.ne.s32.totalorder %s20, %s21
    %p33 = scmp.eq.s32.totalorder %s16, 1
    %p34 = por %p32, %p33
    %p36 = scmp.ne.s32.totalorder %s21, %s35
    %p37 = scmp.eq.s32.totalorder %s16, 0
    %p38 = por %p36, %p37
    %s39 = ssub.s32 %s10, %s17
    %p40 = scmp.eq.s32.totalorder %s39, 0
    %s42 = sadd.s32 %s41, 1
    %s43 = scalar_select %p40, %s41, %s42
    %p46 = pneg %p40
    %p47 = scmp.eq.s32.totalorder %s10, 1
    %p48 = por %p46, %p47
    %p49 = scmp.ne.s32.totalorder %s41, %s44
    %p50 = scmp.eq.s32.totalorder %s10, 0
    %p51 = por %p49, %p50
    %p52 = scmp.ne.s32.totalorder %s41, %s44
    %p53 = scmp.eq.s32.totalorder %s15, 1
    %p54 = por %p52, %p53
    %p55 = scmp.ne.s32.totalorder %s44, %s45
    %p56 = scmp.eq.s32.totalorder %s15, 0
    %p57 = por %p55, %p56
    %p58 = scmp.ne.s32.totalorder %s44, %s45
    %p59 = scmp.eq.s32.totalorder %s16, 1
    %p60 = por %p58, %p59
    %p62 = scmp.ne.s32.totalorder %s45, %s61
    %p63 = scmp.eq.s32.totalorder %s16, 0
    %p64 = por %p62, %p63
    %s65 = ssub.s32 %s10, %s17
    %p66 = scmp.eq.s32.totalorder %s65, 0
    %s68 = sadd.s32 %s67, 1
    %s69 = scalar_select %p66, %s67, %s68
    %p72 = pneg %p66
    %p73 = scmp.eq.s32.totalorder %s10, 1
    %p74 = por %p72, %p73
    %p75 = scmp.ne.s32.totalorder %s67, %s70
    %p76 = scmp.eq.s32.totalorder %s10, 0
    %p77 = por %p75, %p76
    %p78 = scmp.ne.s32.totalorder %s67, %s70
    %p79 = scmp.eq.s32.totalorder %s15, 1
    %p80 = por %p78, %p79
    %p81 = scmp.ne.s32.totalorder %s70, %s71
    %p82 = scmp.eq.s32.totalorder %s15, 0
    %p83 = por %p81, %p82
    %p84 = scmp.ne.s32.totalorder %s70, %s71
    %p85 = scmp.eq.s32.totalorder %s16, 1
    %p86 = por %p84, %p85
    %p88 = scmp.ne.s32.totalorder %s71, %s87
    %p89 = scmp.eq.s32.totalorder %s16, 0
    %p90 = por %p88, %p89
    %s91 = ssub.s32 %s10, %s17
    %p92 = scmp.eq.s32.totalorder %s91, 0
    %s94 = sadd.s32 %s93, 1
    %s95 = scalar_select %p92, %s93, %s94
    %p98 = pneg %p92
    %p99 = scmp.eq.s32.totalorder %s10, 1
    %p100 = por %p98, %p99
    %p101 = scmp.ne.s32.totalorder %s93, %s96
    %p102 = scmp.eq.s32.totalorder %s10, 0
    %p103 = por %p101, %p102
    %p104 = scmp.ne.s32.totalorder %s93, %s96
    %p105 = scmp.eq.s32.totalorder %s15, 1
    %p106 = por %p104, %p105
    %p107 = scmp.ne.s32.totalorder %s96, %s97
    %p108 = scmp.eq.s32.totalorder %s15, 0
    %p109 = por %p107, %p108
    %p110 = scmp.ne.s32.totalorder %s96, %s97
    %p111 = scmp.eq.s32.totalorder %s16, 1
    %p112 = por %p110, %p111
    %p114 = scmp.ne.s32.totalorder %s97, %s113
    %p115 = scmp.eq.s32.totalorder %s16, 0
    %p116 = por %p114, %p115
    %p117 = scmp.le.s32.totalorder 1, %s10
    %p118 = scmp.lt.s32.totalorder %s10, 3
    %p119 = pnand %p117, %p118
    %p120 = pneg %p119
    // Predicated region
    $region9: #{residual_forward.1} parent=5 // pred_check
      _
    $region10: #{residual_forward.1} parent=5 // pred_check_branch
      %122 = sbr.rel (%p119) target = $region12
    $region11: #{residual_forward.1} parent=5 // pred_region
      %s123 = ssub.s32 %s10, 1
      // Predicated region
      $region13: #{residual_forward.1} parent=11 // pred_check
        %p124 = pneg %p31
      $region14: #{residual_forward.1} parent=11 // pred_check_branch
        %126 = sbr.rel (%p124) target = $region16
      $region15: #{residual_forward.1} parent=11 // pred_region
        _
      $region16: #{residual_forward.1} parent=11 // pred_fallthru
        _
    $region12: #{residual_forward.1} parent=5 // pred_fallthru
      _
    %p127 = scmp.lt.s32.totalorder %s10, 2
    // Predicated region
    $region17: #{residual_forward.1} parent=5 // pred_check
      %p128 = pneg %p127
    $region18: #{residual_forward.1} parent=5 // pred_check_branch
      %130 = sbr.rel (%p128) target = $region20
    $region19: #{residual_forward.1} parent=5 // pred_region
      // Predicated region
      $region21: #{residual_forward.1} parent=19 // pred_check
        %p131 = pneg %p51
      $region22: #{residual_forward.1} parent=19 // pred_check_branch
        %133 = sbr.rel (%p131) target = $region24
      $region23: #{residual_forward.1} parent=19 // pred_region
        %p134 = scmp.lt.s32.totalorder %s10, 1
        %s135 = scalar_select %p134, %s10, 1
        %s136 = smul.addr %s135, 8
        %s137 = scalar_lea.vmem %s1, %s136
      $region24: #{residual_forward.1} parent=19 // pred_fallthru
        _
      // Predicated region
      $region25: #{residual_forward.1} parent=19 // pred_check
        %p138 = pneg %p77
      $region26: #{residual_forward.1} parent=19 // pred_check_branch
        %140 = sbr.rel (%p138) target = $region28
      $region27: #{residual_forward.1} parent=19 // pred_region
        %p141 = scmp.lt.s32.totalorder %s10, 1
        %s142 = scalar_select %p141, %s10, 1
        %s143 = smul.addr %s142, 8
        %s144 = scalar_lea.vmem %s2, %s143
      $region28: #{residual_forward.1} parent=19 // pred_fallthru
        _
    $region20: #{residual_forward.1} parent=5 // pred_fallthru
      _
    %p145 = scmp.le.s32.totalorder 1, %s10
    %p146 = scmp.lt.s32.totalorder %s10, 3
    %p147 = pnand %p145, %p146
    %p148 = pneg %p147
    // Predicated region
    $region29: #{residual_forward.1} parent=5 // pred_check
      _
    $region30: #{residual_forward.1} parent=5 // pred_check_branch
      %150 = sbr.rel (%p147) target = $region32
    $region31: #{residual_forward.1} parent=5 // pred_region
      %s151 = ssub.s32 %s10, 1
      %p152 = pneg %p31
      %p153 = pneg %p28
      %p154 = scmp.lt.s32.totalorder %s15, 1
      %s155 = scalar_select %p154, %s15, 1
      %s156 = smul.addr %s155, 8
      %s157 = scalar_lea.vmem %s1, %s156
      %p158 = pneg %p57
      %p159 = pneg %p54
      %p160 = scmp.lt.s32.totalorder %s15, 1
      %s161 = scalar_select %p160, %s15, 1
      %s162 = smul.addr %s161, 8
      %s163 = scalar_lea.vmem %s2, %s162
      %p164 = pneg %p83
      %p165 = pneg %p80
      %p166 = pneg %p109
      %p167 = pneg %p106
      %p168 = scmp.lt.s32.totalorder %s15, 1
      %s169 = scalar_select %p168, %s15, 1
      %s170 = smul.addr %s169, 8
      %s171 = scalar_lea.vmem %s3, %s170
      %p172 = scmp.lt.s32.totalorder %s15, 1
      %s173 = scalar_select %p172, %s15, 1
      %s174 = smul.addr %s173, 8
      %s175 = scalar_lea.vmem %s1, %s174
      %p176 = scmp.lt.s32.totalorder %s15, 1
      %s177 = scalar_select %p176, %s15, 1
      %s178 = smul.addr %s177, 8
      %s179 = scalar_lea.vmem %s2, %s178
      %p180 = scmp.lt.s32.totalorder %s15, 1
      %s181 = scalar_select %p180, %s15, 1
      %s182 = smul.addr %s181, 8
      %s183 = scalar_lea.vmem %s3, %s182
      %s184 = sld [smem:[#allocation2]]
      %v185 = vld [vmem:[%s175] sm:$0xff]
      %v186 = vld [vmem:[%s179] sm:$0xff]
      %v187 = vstv %s184
      %v188 = vmul.f32 %v187, %v186
      %v189 = vadd.f32 %v185, %v188
      %190 = vst [vmem:[%s183] sm:$0xff] %v189
      %p191 = scmp.lt.s32.totalorder %s15, 1
      %s192 = scalar_select %p191, %s15, 1
      %s193 = smul.addr %s192, 8
      %s194 = scalar_lea.vmem %s3, %s193
      // Predicated region
      $region33: #{residual_forward.1} parent=31 // pred_check
        %p195 = pneg %p106
      $region34: #{residual_forward.1} parent=31 // pred_check_branch
        %197 = sbr.rel (%p195) target = $region36
      $region35: #{residual_forward.1} parent=31 // pred_region
        _
      $region36: #{residual_forward.1} parent=31 // pred_fallthru
        _
    $region32: #{residual_forward.1} parent=5 // pred_fallthru
      _
    %p198 = scmp.le.s32.totalorder 2, %s10
    // Predicated region
    $region37: #{residual_forward.1} parent=5 // pred_check
      %p199 = pneg %p198
    $region38: #{residual_forward.1} parent=5 // pred_check_branch
      %201 = sbr.rel (%p199) target = $region40
    $region39: #{residual_forward.1} parent=5 // pred_region
      %s202 = ssub.s32 %s10, 2
      // Predicated region
      $region41: #{residual_forward.1} parent=39 // pred_check
        %p203 = pneg %p112
      $region42: #{residual_forward.1} parent=39 // pred_check_branch
        %205 = sbr.rel (%p203) target = $region44
      $region43: #{residual_forward.1} parent=39 // pred_region
        %p206 = scmp.lt.s32.totalorder %s16, 1
        %s207 = scalar_select %p206, %s16, 1
        %s208 = smul.addr %s207, 8
        %s209 = scalar_lea.vmem %s3, %s208
      $region44: #{residual_forward.1} parent=39 // pred_fallthru
        _
    $region40: #{residual_forward.1} parent=5 // pred_fallthru
      _
  $region6: #{residual_forward.1} parent=0 // loop_footer
    %s14 = sadd.s32 1, %s10
  $region7: #{residual_forward.1} parent=0 // loop_footer_branch
    %9 = sbr.rel target = $region3
  $region8: #{residual_forward.1} parent=0 // loop_exit
    _

</llo_original>
